<compile_context>
chip_gen: v5e
topology: v5e:2x2
jax: 0.10.0
libtpu: 0.0.40
codegen_flags: <defaults>
</compile_context>

<pallas_src>
import jax
import jax.numpy as jnp
from jax.experimental import pallas as pl
from jax.experimental.pallas import tpu as pltpu


def _round_up(x, m):
    return (x + m - 1) // m * m


# ---------------------------------------------------------------------------
# Kernels
# ---------------------------------------------------------------------------

def _fc_body(x, w1_ref, b1_ref, w2_ref, b2_ref, out_ref):
    # fc1 + relu: bf16 MXU inputs, f32 accumulation.
    y = jnp.dot(x.astype(jnp.bfloat16), w1_ref[...],
                preferred_element_type=jnp.float32) + b1_ref[...]
    y = jnp.maximum(y, 0.0)

    # dropout: eval-mode identity.
    # TODO(synk): training-mode dropout (p=0.1) via pltpu.prng_seed / prng_random_bits.

    # residual add in f32, then fc2 (bf16 MXU, f32 accumulation) into the lane-dense padded output.
    z = y + x
    out = jnp.dot(z.astype(jnp.bfloat16), w2_ref[...],
                  preferred_element_type=jnp.float32) + b2_ref[...]
    out_ref[...] = out.astype(out_ref.dtype)


def res_predictor_kernel_reg(doc_ref, qry_ref, w1_ref, b1_ref, w2_ref, b2_ref, out_ref):
    # E not lane-aligned (E % 128 != 0): build x as a register value. Column-sliced VMEM stores
    # would be masked vst.msk plus a store->load round trip serializing before the fc1 dot.
    d = doc_ref[...].astype(jnp.float32)
    q = qry_ref[...].astype(jnp.float32)
    x = jnp.concatenate(
        [d, q, jnp.abs(d - q), jnp.square(jnp.maximum(d, q))], axis=-1)
    _fc_body(x, w1_ref, b1_ref, w2_ref, b2_ref, out_ref)


def res_predictor_kernel_scratch(doc_ref, qry_ref, w1_ref, b1_ref, w2_ref, b2_ref,
                                 out_ref, x_ref):
    # E multiple of 128: tile-aligned column stores into a persistent VMEM x buffer
    # (no lane-axis concatenate, x reused for both the fc1 input and the residual add).
    E = doc_ref.shape[-1]
    d = doc_ref[...].astype(jnp.float32)
    q = qry_ref[...].astype(jnp.float32)
    x_ref[:, 0:E] = d
    x_ref[:, E:2 * E] = q
    x_ref[:, 2 * E:3 * E] = jnp.abs(d - q)
    x_ref[:, 3 * E:4 * E] = jnp.square(jnp.maximum(d, q))
    _fc_body(x_ref[...], w1_ref, b1_ref, w2_ref, b2_ref, out_ref)


# ---------------------------------------------------------------------------
# Tiling / spec helpers
# ---------------------------------------------------------------------------

_HAS_BUFFERED = hasattr(pl, "Buffered")


def _const_spec(shape):
    """BlockSpec for a grid-invariant operand; single-buffered when supported (it is never
    re-fetched, so double-buffering only wastes VMEM -- critical on v7x's 64 MiB VMEM)."""
    idx = lambda i: (0, 0)
    if _HAS_BUFFERED:
        try:
            return pl.BlockSpec(shape, idx, pipeline_mode=pl.Buffered(1))
        except TypeError:
            pass
    return pl.BlockSpec(shape, idx)


def _block_cap(E, input_size, out_pad, in_itemsize, sub):
    """VMEM-aware upper bound on the batch tile (rows)."""
    weight_bytes = input_size * (input_size + out_pad) * 2          # bf16, single-buffered
    row_bytes = (2 * 2 * E * in_itemsize                            # doc + qry, double-buffered
                 + 2 * out_pad * 4                                  # out, double-buffered
                 + 4 * input_size * 4)                              # x / y / z (+ scratch) f32
    budget = max((40 << 20) - weight_bytes, 2 << 20)                # stay well under v7x VMEM
    cap = min(1024, budget // row_bytes)
    return max(sub, cap - cap % sub)


def _pick_block_b(B, sub, cap):
    """Pick (block_b, B_pad): multiple of `sub` (or == B), preferring a divisor of B
    (no wrapper-side jnp.pad) and >= 2 grid steps for larger B (v7x 2-TC sharding)."""
    cap = max(sub, cap - cap % sub)
    if B <= sub:
        return B, B                                   # single full tile (block == full dim)
    if B % sub == 0:
        if B <= cap:
            target = max(sub, _round_up(B // 2, sub))  # aim for >= 2 grid steps
        else:
            target = cap
        bb = target - target % sub
        while bb >= sub:
            # accept a divisor only if the tile is reasonably large or the step count stays small
            if B % bb == 0 and (bb >= 128 or B // bb <= 64):
                return bb, B                          # divides evenly -> no padding
            bb -= sub
    if B <= cap:
        return B, B                                   # single full tile, no alignment needed
    return cap, _round_up(B, cap)                     # rare fallback: pad the batch


def _vmem_limit_bytes(block_b, E, input_size, out_pad, in_itemsize, use_scratch):
    est = (
        2 * 2 * block_b * E * in_itemsize             # doc + qry, double-buffered
        + input_size * input_size * 2                 # W1 bf16 (single-buffered)
        + input_size * out_pad * 2                    # W2 bf16 (single-buffered)
        + 8 * input_size * 4 + 8 * out_pad * 4        # biases (sublane-padded)
        + 2 * block_b * out_pad * 4                   # out, double-buffered
        + (block_b * input_size * 4 if use_scratch else 0)
        + 3 * block_b * input_size * 4                # x / y / z live temporaries
    )
    # 2x headroom; at least 32 MiB (v5e's default scoped limit is only 16 MiB), at most 64 MiB
    # (v7x physical VMEM) so one setting is safe across generations.
    return int(min(max(2 * est, 32 << 20), 64 << 20))


# ---------------------------------------------------------------------------
# Wrapper
# ---------------------------------------------------------------------------

def res_predictor(doc_emb, qry_emb, w1, b1, w2, b2, *, block_b=None, return_padded=False):
    B, E = doc_emb.shape
    input_size = 4 * E
    output_size = w2.shape[1]
    # The residual y + x requires fc1 to be square (input_size == 4E).
    assert w1.shape == (input_size, input_size)
    assert w2.shape[0] == input_size

    in_itemsize = doc_emb.dtype.itemsize
    sub = {4: 8, 2: 16, 1: 32}.get(in_itemsize, 8)    # sublane multiple per input dtype

    # Lane-dense output: zero-pad output columns to a multiple of 128 (unmasked stores).
    out_pad = _round_up(output_size, 128)

    if block_b is None:
        cap = _block_cap(E, input_size, out_pad, in_itemsize, sub)
        block_b, B_pad = _pick_block_b(B, sub, cap)
    else:
        assert block_b == B or block_b % sub == 0
        B_pad = _round_up(B, block_b)

    # Padding the batch is a rare fallback (pathological B); the common path avoids this
    # extra HBM read+write pass entirely.
    if B_pad != B:
        pad_rows = B_pad - B
        doc_emb = jnp.pad(doc_emb, ((0, pad_rows), (0, 0)))
        qry_emb = jnp.pad(qry_emb, ((0, pad_rows), (0, 0)))

    # Weights in bf16 (MXU inputs); biases f32, zero-padded to the lane-dense output width.
    # TODO(synk): hot-path callers should pass pre-cast / pre-padded weights so these casts/pads
    #             happen once, not per call.
    w1_bf16 = w1.astype(jnp.bfloat16)
    b1_2d = b1.reshape(1, input_size).astype(jnp.float32)
    w2_bf16 = jnp.pad(w2, ((0, 0), (0, out_pad - output_size))).astype(jnp.bfloat16)
    b2_2d = jnp.pad(b2.reshape(1, output_size),
                    ((0, 0), (0, out_pad - output_size))).astype(jnp.float32)

    use_scratch = (E % 128 == 0)
    kernel = res_predictor_kernel_scratch if use_scratch else res_predictor_kernel_reg
    scratch_shapes = ([pltpu.VMEM((block_b, input_size), jnp.float32)]
                      if use_scratch else [])

    assert B_pad % block_b == 0
    grid = (B_pad // block_b,)

    flops = 2 * B_pad * input_size * (input_size + out_pad)
    bytes_accessed = (
        2 * B_pad * E * in_itemsize                  # doc + qry
        + w1_bf16.size * 2 + w2_bf16.size * 2        # bf16 weights
        + b1_2d.size * 4 + b2_2d.size * 4            # biases
        + B_pad * out_pad * doc_emb.dtype.itemsize   # output
    )

    out = pl.pallas_call(
        kernel,
        out_shape=jax.ShapeDtypeStruct((B_pad, out_pad), doc_emb.dtype),
        grid_spec=pltpu.PrefetchScalarGridSpec(
            num_scalar_prefetch=0,
            grid=grid,
            in_specs=[
                pl.BlockSpec((block_b, E), lambda i: (i, 0)),   # doc_emb
                pl.BlockSpec((block_b, E), lambda i: (i, 0)),   # qry_emb
                _const_spec((input_size, input_size)),          # W1 (bf16, Buffered(1))
                _const_spec((1, input_size)),                   # b1
                _const_spec((input_size, out_pad)),             # W2 (bf16, lane-padded)
                _const_spec((1, out_pad)),                      # b2 (lane-padded)
            ],
            out_specs=pl.BlockSpec((block_b, out_pad), lambda i: (i, 0)),
            scratch_shapes=scratch_shapes,
        ),
        compiler_params=pltpu.CompilerParams(
            dimension_semantics=("parallel",),
            vmem_limit_bytes=_vmem_limit_bytes(block_b, E, input_size, out_pad,
                                               in_itemsize, use_scratch),
        ),
        cost_estimate=pl.CostEstimate(
            flops=flops, transcendentals=0, bytes_accessed=bytes_accessed),
    )(doc_emb, qry_emb, w1_bf16, b1_2d, w2_bf16, b2_2d)

    if return_padded:
        # Downstream consumes the zero-padded columns directly: skips an extra HBM copy pass.
        return out
    if B_pad != B or out_pad != output_size:
        out = out[:B, :output_size]
    return out


# ---------------------------------------------------------------------------
# References & demo
# ---------------------------------------------------------------------------

def reference_f32(doc_emb, qry_emb, w1, b1, w2, b2):
    sub_emb = jnp.abs(doc_emb - qry_emb)
    max_emb = jnp.square(jnp.maximum(doc_emb, qry_emb))
    x = jnp.concatenate([doc_emb, qry_emb, sub_emb, max_emb], axis=-1)
    y = jnp.maximum(x @ w1 + b1, 0.0)
    return (y + x) @ w2 + b2


def reference_bf16(doc_emb, qry_emb, w1, b1, w2, b2):
    # Mirrors the kernel's precision: bf16 MXU inputs, f32 accumulation, f32 elementwise.
    sub_emb = jnp.abs(doc_emb - qry_emb)
    max_emb = jnp.square(jnp.maximum(doc_emb, qry_emb))
    x = jnp.concatenate([doc_emb, qry_emb, sub_emb, max_emb], axis=-1)
    y = jnp.dot(x.astype(jnp.bfloat16), w1.astype(jnp.bfloat16),
                preferred_element_type=jnp.float32) + b1
    y = jnp.maximum(y, 0.0)
    z = y + x
    return jnp.dot(z.astype(jnp.bfloat16), w2.astype(jnp.bfloat16),
                   preferred_element_type=jnp.float32) + b2


if __name__ == "__main__":
    # Small shapes: emb dim E=32 -> input_size=128 (fc1 is square: 4*E == input_size),
    # output_size=32, batch B=8.
    B, E = 8, 32
    input_size = 4 * E
    output_size = 32
    initializer_range = 0.02

    key = jax.random.PRNGKey(0)
    k_doc, k_qry, k_w1, k_w2 = jax.random.split(key, 4)

    doc_emb = jax.random.normal(k_doc, (B, E), dtype=jnp.float32)
    qry_emb = jax.random.normal(k_qry, (B, E), dtype=jnp.float32)

    # Deterministic init matching module.init_weights: weights ~ N(0, initializer_range), biases zero.
    # (Stored pre-transposed, i.e. (in, out), relative to PyTorch's (out, in).)
    w1 = initializer_range * jax.random.normal(k_w1, (input_size, input_size), dtype=jnp.float32)
    b1 = jnp.zeros((input_size,), dtype=jnp.float32)
    w2 = initializer_range * jax.random.normal(k_w2, (input_size, output_size), dtype=jnp.float32)
    b2 = jnp.zeros((output_size,), dtype=jnp.float32)

    out = res_predictor(doc_emb, qry_emb, w1, b1, w2, b2)
    out = jax.block_until_ready(out)
    assert out.shape == (B, output_size)

    # Tight check against a precision-matched (bf16-MXU) reference.
    ref_bf16 = reference_bf16(doc_emb, qry_emb, w1, b1, w2, b2)
    assert jnp.allclose(out, ref_bf16, atol=1e-2, rtol=1e-2), "mismatch vs bf16-matched reference"

    # Looser sanity check against the pure-f32 reference (bf16 MXU rounding only).
    ref_f32 = reference_f32(doc_emb, qry_emb, w1, b1, w2, b2)
    assert jnp.allclose(out, ref_f32, atol=5e-2, rtol=5e-2), "mismatch vs f32 reference"

    print("KERNEL_OK")
</pallas_src>

<mosaic_0001>
module attributes {stable_mosaic.version = 11 : i64} {
  func.func @res_predictor_kernel_reg(%arg0: i32, %arg1: memref<8x32xf32, #tpu.memory_space<vmem>>, %arg2: memref<8x32xf32, #tpu.memory_space<vmem>>, %arg3: memref<128x128xbf16, #tpu.memory_space<vmem>>, %arg4: memref<1x128xf32, #tpu.memory_space<vmem>>, %arg5: memref<128x128xbf16, #tpu.memory_space<vmem>>, %arg6: memref<1x128xf32, #tpu.memory_space<vmem>>, %arg7: memref<8x128xf32, #tpu.memory_space<vmem>>) attributes {dimension_semantics = [#tpu.dimension_semantics<parallel>], iteration_bounds = array<i64: 1>, scalar_prefetch = 0 : i64, scratch_operands = 0 : i64, tpu.core_type = #tpu.core_type<tc>, window_params = [{transform_indices = @transform_0, window_bounds = array<i64: 8, 32>}, {transform_indices = @transform_1, window_bounds = array<i64: 8, 32>}, {pipeline_mode = #tpu.pipeline_mode<synchronous>, transform_indices = @transform_2, window_bounds = array<i64: 128, 128>}, {pipeline_mode = #tpu.pipeline_mode<synchronous>, transform_indices = @transform_3, window_bounds = array<i64: 1, 128>}, {pipeline_mode = #tpu.pipeline_mode<synchronous>, transform_indices = @transform_4, window_bounds = array<i64: 128, 128>}, {pipeline_mode = #tpu.pipeline_mode<synchronous>, transform_indices = @transform_5, window_bounds = array<i64: 1, 128>}, {transform_indices = @transform_6, window_bounds = array<i64: 8, 128>}]} {
    %c0 = arith.constant 0 : index
    %c0_0 = arith.constant 0 : index
    %0 = vector.load %arg1[%c0, %c0_0] : memref<8x32xf32, #tpu.memory_space<vmem>>, vector<8x32xf32>
    %c0_1 = arith.constant 0 : index
    %c0_2 = arith.constant 0 : index
    %1 = vector.load %arg2[%c0_1, %c0_2] : memref<8x32xf32, #tpu.memory_space<vmem>>, vector<8x32xf32>
    %2 = arith.subf %0, %1 : vector<8x32xf32>
    %3 = math.absf %2 : vector<8x32xf32>
    %4 = arith.maximumf %0, %1 : vector<8x32xf32>
    %5 = arith.mulf %4, %4 : vector<8x32xf32>
    %6 = tpu.concatenate %0, %1, %3, %5 in 1 : vector<8x32xf32>, vector<8x32xf32>, vector<8x32xf32>, vector<8x32xf32> -> vector<8x128xf32>
    %7 = arith.truncf %6 : vector<8x128xf32> to vector<8x128xbf16>
    %c0_3 = arith.constant 0 : index
    %c0_4 = arith.constant 0 : index
    %8 = vector.load %arg3[%c0_3, %c0_4] : memref<128x128xbf16, #tpu.memory_space<vmem>>, vector<128x128xbf16>
    %cst = arith.constant dense<0.000000e+00> : vector<8x128xf32>
    %9 = tpu.matmul %7, %8, %cst {dimension_numbers = #tpu.dot_dimension_numbers<[1], [0], [0], [1], [0, 0, 1, 1], [], []>} : vector<8x128xbf16>, vector<128x128xbf16>, vector<8x128xf32> -> vector<8x128xf32>
    %c0_5 = arith.constant 0 : index
    %c0_6 = arith.constant 0 : index
    %10 = vector.load %arg4[%c0_5, %c0_6] : memref<1x128xf32, #tpu.memory_space<vmem>>, vector<1x128xf32>
    %11 = vector.broadcast %10 : vector<1x128xf32> to vector<8x128xf32>
    %12 = arith.addf %9, %11 : vector<8x128xf32>
    %cst_7 = arith.constant 0.000000e+00 : f32
    %13 = vector.broadcast %cst_7 : f32 to vector<8x128xf32>
    %14 = arith.maximumf %12, %13 : vector<8x128xf32>
    %15 = arith.addf %14, %6 : vector<8x128xf32>
    %16 = arith.truncf %15 : vector<8x128xf32> to vector<8x128xbf16>
    %c0_8 = arith.constant 0 : index
    %c0_9 = arith.constant 0 : index
    %17 = vector.load %arg5[%c0_8, %c0_9] : memref<128x128xbf16, #tpu.memory_space<vmem>>, vector<128x128xbf16>
    %cst_10 = arith.constant dense<0.000000e+00> : vector<8x128xf32>
    %18 = tpu.matmul %16, %17, %cst_10 {dimension_numbers = #tpu.dot_dimension_numbers<[1], [0], [0], [1], [0, 0, 1, 1], [], []>} : vector<8x128xbf16>, vector<128x128xbf16>, vector<8x128xf32> -> vector<8x128xf32>
    %c0_11 = arith.constant 0 : index
    %c0_12 = arith.constant 0 : index
    %19 = vector.load %arg6[%c0_11, %c0_12] : memref<1x128xf32, #tpu.memory_space<vmem>>, vector<1x128xf32>
    %20 = vector.broadcast %19 : vector<1x128xf32> to vector<8x128xf32>
    %21 = arith.addf %18, %20 : vector<8x128xf32>
    %c0_13 = arith.constant 0 : index
    %c0_14 = arith.constant 0 : index
    %22 = vector.load %arg7[%c0_13, %c0_14] : memref<8x128xf32, #tpu.memory_space<vmem>>, vector<8x128xf32>
    tpu.vector_store %arg7[%c0_13, %c0_14], %21 {strides = array<i32>} : memref<8x128xf32, #tpu.memory_space<vmem>>, vector<8x128xf32>,
    return
  }
  func.func @transform_0(%arg0: i32) -> (i32, i32) {
    %c0_i32 = arith.constant 0 : i32
    %c0_i32_0 = arith.constant 0 : i32
    return %arg0, %c0_i32 : i32, i32
  }
  func.func @transform_1(%arg0: i32) -> (i32, i32) {
    %c0_i32 = arith.constant 0 : i32
    %c0_i32_0 = arith.constant 0 : i32
    return %arg0, %c0_i32 : i32, i32
  }
  func.func @transform_2(%arg0: i32) -> (i32, i32) {
    %c0_i32 = arith.constant 0 : i32
    %c0_i32_0 = arith.constant 0 : i32
    %c0_i32_1 = arith.constant 0 : i32
    return %c0_i32, %c0_i32_0 : i32, i32
  }
  func.func @transform_3(%arg0: i32) -> (i32, i32) {
    %c0_i32 = arith.constant 0 : i32
    %c0_i32_0 = arith.constant 0 : i32
    %c0_i32_1 = arith.constant 0 : i32
    return %c0_i32, %c0_i32_0 : i32, i32
  }
  func.func @transform_4(%arg0: i32) -> (i32, i32) {
    %c0_i32 = arith.constant 0 : i32
    %c0_i32_0 = arith.constant 0 : i32
    %c0_i32_1 = arith.constant 0 : i32
    return %c0_i32, %c0_i32_0 : i32, i32
  }
  func.func @transform_5(%arg0: i32) -> (i32, i32) {
    %c0_i32 = arith.constant 0 : i32
    %c0_i32_0 = arith.constant 0 : i32
    %c0_i32_1 = arith.constant 0 : i32
    return %c0_i32, %c0_i32_0 : i32, i32
  }
  func.func @transform_6(%arg0: i32) -> (i32, i32) {
    %c0_i32 = arith.constant 0 : i32
    %c0_i32_0 = arith.constant 0 : i32
    return %arg0, %c0_i32 : i32, i32
  }
}

</mosaic_0001>

<llo_original>
// kernel: tpu_custom_call.1
$region0: #{tpu_custom_call.1}
  #allocation0 [shape = 'u32[]', space=smem, size = 0x4, offset = 0x4, fixed_abs, tag = 'smem constant byte address 0x4 - core index']
  #allocation1 [shape = 'u32[72,128]{1,0:T(1,128)}', space=vmem, size = 0x9000, scoped, tag = 'internal scratch']
  %s0 = inlined_call_operand.hbm [shape: f32[8,32], index: 0, kind: input, shape index: {}]
  %s1 = inlined_call_operand.hbm [shape: f32[8,32], index: 1, kind: input, shape index: {}]
  %s2 = inlined_call_operand.hbm [shape: bf16[128,128], index: 2, kind: input, shape index: {}]
  %s3 = inlined_call_operand.vmem [shape: f32[1,128], index: 3, kind: input, shape index: {}]
  %s4 = inlined_call_operand.hbm [shape: bf16[128,128], index: 4, kind: input, shape index: {}]
  %s5 = inlined_call_operand.vmem [shape: f32[1,128], index: 5, kind: input, shape index: {}]
  %s6 = inlined_call_operand.hbm [shape: f32[8,128], index: 6, kind: output, shape index: {}]
  %s7 = sld [smem:[#allocation0]]
  $region50: #{tpu_custom_call.1} parent=0
    _
  %s9 = ssub.s32 1, %s7
  %s10 = scalar_select 0, %s9, %s7
  $region1: #{tpu_custom_call.1} parent=0
    #allocation2 [shape = 'u8[4096]{0}', space=vmem, size = 0x1000, scoped, tag = 'input window, operand 0, single buffered']
    #allocation3 [shape = 's32[1]{0}', space=sflag, size = 0x4, scoped, tag = 'scoped memory for tpu_custom_call.1']
    #allocation4 [shape = 's32[1]{0}', space=sflag, size = 0x4, scoped, tag = 'scoped memory for tpu_custom_call.1']
    #allocation5 [shape = 'u8[4096]{0}', space=vmem, size = 0x1000, scoped, tag = 'input window, operand 1, single buffered']
    #allocation6 [shape = 's32[1]{0}', space=sflag, size = 0x4, scoped, tag = 'scoped memory for tpu_custom_call.1']
    #allocation7 [shape = 'u8[32768]{0}', space=vmem, size = 0x8000, scoped, tag = 'input window, operand 2, single buffered']
    #allocation8 [shape = 'u8[32768]{0}', space=vmem, size = 0x8000, scoped, tag = 'input window, operand 4, single buffered']
    #allocation9 [shape = 's32[1]{0}', space=sflag, size = 0x4, scoped, tag = 'scoped memory for tpu_custom_call.1']
    #allocation10 [shape = 'u8[4096]{0}', space=vmem, size = 0x1000, scoped, tag = 'output window, operand 0, single buffered']
    %11 = vsyncpa [#allocation3], 0
    %12 = vsyncpa [#allocation6], 0
    %13 = vsyncpa [#allocation9], 0
    %14 = vsyncpa [#allocation4], 0
    // Predicated region
    $region2: #{tpu_custom_call.1} parent=1 // pred_check
      _
    $region3: #{tpu_custom_call.1} parent=1 // pred_check_branch
      %16 = sbr.rel (0) target = $region5
    $region4: #{tpu_custom_call.1} parent=1 // pred_region
      %18 = vsyncadd [#allocation3], 0
      %s20 = sshll.u32 %s0, 4
      %s21 = int_to_ptr.hbm [resolvable:$true] %s20
      %s22 = sshll.u32 [#allocation2], 4
      %s23 = int_to_ptr.vmem [resolvable:$true] %s22
      %25 = dma.hbm_to_vmem [thread:$0]  %s21, 128, %s23, [#allocation3]
    $region5: #{tpu_custom_call.1} parent=1 // pred_fallthru
      _
    // Predicated region
    $region6: #{tpu_custom_call.1} parent=1 // pred_check
      _
    $region7: #{tpu_custom_call.1} parent=1 // pred_check_branch
      %27 = sbr.rel (0) target = $region9
    $region8: #{tpu_custom_call.1} parent=1 // pred_region
      %29 = vsyncadd [#allocation6], 0
      %s31 = sshll.u32 %s1, 4
      %s32 = int_to_ptr.hbm [resolvable:$true] %s31
      %s33 = sshll.u32 [#allocation5], 4
      %s34 = int_to_ptr.vmem [resolvable:$true] %s33
      %36 = dma.hbm_to_vmem [thread:$0]  %s32, 128, %s34, [#allocation6]
    $region9: #{tpu_custom_call.1} parent=1 // pred_fallthru
      _
    // Predicated region
    $region10: #{tpu_custom_call.1} parent=1 // pred_check
      _
    $region11: #{tpu_custom_call.1} parent=1 // pred_check_branch
      %38 = sbr.rel (0) target = $region13
    $region12: #{tpu_custom_call.1} parent=1 // pred_region
      %40 = vsyncadd [#allocation6], 0
      %s41 = sshll.u32 %s2, 4
      %s42 = int_to_ptr.hbm [resolvable:$true] %s41
      %s43 = sshll.u32 [#allocation7], 4
      %s44 = int_to_ptr.vmem [resolvable:$true] %s43
      %49 = dma.hbm_to_vmem [thread:$0]  %s42, 1024, %s44, [#allocation6], 64, 64, 4
    $region13: #{tpu_custom_call.1} parent=1 // pred_fallthru
      _
    // Predicated region
    $region14: #{tpu_custom_call.1} parent=1 // pred_check
      _
    $region15: #{tpu_custom_call.1} parent=1 // pred_check_branch
      %51 = sbr.rel (0) target = $region17
    $region16: #{tpu_custom_call.1} parent=1 // pred_region
      _
    $region17: #{tpu_custom_call.1} parent=1 // pred_fallthru
      _
    // Predicated region
    $region18: #{tpu_custom_call.1} parent=1 // pred_check
      _
    $region19: #{tpu_custom_call.1} parent=1 // pred_check_branch
      %53 = sbr.rel (0) target = $region21
    $region20: #{tpu_custom_call.1} parent=1 // pred_region
      %55 = vsyncadd [#allocation9], 0
      %s56 = sshll.u32 %s4, 4
      %s57 = int_to_ptr.hbm [resolvable:$true] %s56
      %s58 = sshll.u32 [#allocation8], 4
      %s59 = int_to_ptr.vmem [resolvable:$true] %s58
      %64 = dma.hbm_to_vmem [thread:$0]  %s57, 1024, %s59, [#allocation9], 64, 64, 4
    $region21: #{tpu_custom_call.1} parent=1 // pred_fallthru
      _
    // Predicated region
    $region22: #{tpu_custom_call.1} parent=1 // pred_check
      _
    $region23: #{tpu_custom_call.1} parent=1 // pred_check_branch
      %66 = sbr.rel (0) target = $region25
    $region24: #{tpu_custom_call.1} parent=1 // pred_region
      _
    $region25: #{tpu_custom_call.1} parent=1 // pred_fallthru
      _
    // Predicated region
    $region26: #{tpu_custom_call.1} parent=1 // pred_check
      _
    $region27: #{tpu_custom_call.1} parent=1 // pred_check_branch
      %68 = sbr.rel (0) target = $region29
    $region28: #{tpu_custom_call.1} parent=1 // pred_region
      %70 = dma.done [#allocation3], 128
    $region29: #{tpu_custom_call.1} parent=1 // pred_fallthru
      _
    // Predicated region
    $region30: #{tpu_custom_call.1} parent=1 // pred_check
      _
    $region31: #{tpu_custom_call.1} parent=1 // pred_check_branch
      %72 = sbr.rel (0) target = $region33
    $region32: #{tpu_custom_call.1} parent=1 // pred_region
      %74 = dma.done [#allocation6], 128
    $region33: #{tpu_custom_call.1} parent=1 // pred_fallthru
      _
    // Predicated region
    $region34: #{tpu_custom_call.1} parent=1 // pred_check
      _
    $region35: #{tpu_custom_call.1} parent=1 // pred_check_branch
      %76 = sbr.rel (0) target = $region37
    $region36: #{tpu_custom_call.1} parent=1 // pred_region
      %78 = dma.done [#allocation6], 1024
    $region37: #{tpu_custom_call.1} parent=1 // pred_fallthru
      _
    // Predicated region
    $region38: #{tpu_custom_call.1} parent=1 // pred_check
      _
    $region39: #{tpu_custom_call.1} parent=1 // pred_check_branch
      %80 = sbr.rel (0) target = $region41
    $region40: #{tpu_custom_call.1} parent=1 // pred_region
      %82 = dma.done [#allocation9], 1024
    $region41: #{tpu_custom_call.1} parent=1 // pred_fallthru
      _
    %v83 = vld [vmem:[#allocation2] sm:$0xff]
    %v84 = vld [vmem:[#allocation5] sm:$0xff]
    %v85 = vsub.f32 %v83, %v84
    %v86 = vand.u32 2147483647, %v85
    %v87 = vmax.f32 %v83, %v84
    %v88 = vmul.f32 %v87, %v87
    %90 = vrot.lane.b32.xlu0 %v84, 32
    %v91 = vpop.permute.xlu0 %90
    %94 = vrot.lane.b32.xlu0 %v86, 64
    %v95 = vpop.permute.xlu0 %94
    %98 = vrot.lane.b32.xlu0 %v88, 96
    %v99 = vpop.permute.xlu0 %98
    %vm101 = vcmask 261120
    %v102 = vsel %vm101, %v83, %v91
    %vm103 = vcmask 523264
    %v104 = vsel %vm103, %v102, %v95
    %vm105 = vcmask 785408
    %v106 = vsel %vm105, %v104, %v99
    %v107 = vpack.c.bf16 %v106, %v106
    %v108 = vld [vmem:[#allocation7] sm:$0xf]
    %v109 = vld [vmem:[#allocation7 + $0x4] sm:$0xf]
    %v110 = vld [vmem:[#allocation7 + $0x8] sm:$0xf]
    %v111 = vld [vmem:[#allocation7 + $0xc] sm:$0xf]
    %v112 = vld [vmem:[#allocation7 + $0x10] sm:$0xf]
    %v113 = vld [vmem:[#allocation7 + $0x14] sm:$0xf]
    %v114 = vld [vmem:[#allocation7 + $0x18] sm:$0xf]
    %v115 = vld [vmem:[#allocation7 + $0x1c] sm:$0xf]
    %v116 = vld [vmem:[#allocation7 + $0x20] sm:$0xf]
    %v117 = vld [vmem:[#allocation7 + $0x24] sm:$0xf]
    %v118 = vld [vmem:[#allocation7 + $0x28] sm:$0xf]
    %v119 = vld [vmem:[#allocation7 + $0x2c] sm:$0xf]
    %v120 = vld [vmem:[#allocation7 + $0x30] sm:$0xf]
    %v121 = vld [vmem:[#allocation7 + $0x34] sm:$0xf]
    %v122 = vld [vmem:[#allocation7 + $0x38] sm:$0xf]
    %v123 = vld [vmem:[#allocation7 + $0x3c] sm:$0xf]
    %v124 = vld [vmem:[%s3] sm:$0x1]
    %v126 = vperm.slane %v124, 0
    %v144 = vunpack.c.l.b16 %v108
    %v145 = vunpack.c.l.b16 %v109
    %v146 = vunpack.c.l.b16 %v110
    %v147 = vunpack.c.l.b16 %v111
    %v148 = vunpack.c.l.b16 %v112
    %v149 = vunpack.c.l.b16 %v113
    %v150 = vunpack.c.l.b16 %v114
    %v151 = vunpack.c.l.b16 %v115
    %v152 = vunpack.c.l.b16 %v116
    %v153 = vunpack.c.l.b16 %v117
    %v154 = vunpack.c.l.b16 %v118
    %v155 = vunpack.c.l.b16 %v119
    %v156 = vunpack.c.l.b16 %v120
    %v157 = vunpack.c.l.b16 %v121
    %v158 = vunpack.c.l.b16 %v122
    %v159 = vunpack.c.l.b16 %v123
    %v160 = vpack.c.b16 %v145, %v144
    %v161 = vpack.c.b16 %v147, %v146
    %v162 = vpack.c.b16 %v149, %v148
    %v163 = vpack.c.b16 %v151, %v150
    %v164 = vpack.c.b16 %v153, %v152
    %v165 = vpack.c.b16 %v155, %v154
    %v166 = vpack.c.b16 %v157, %v156
    %v167 = vpack.c.b16 %v159, %v158
    %176 = vmatpush.bf16.msra.mxu0 %v167
    %177 = vmatpush.bf16.msra.mxu0 %v166
    %178 = vmatpush.bf16.msra.mxu0 %v165
    %179 = vmatpush.bf16.msra.mxu0 %v164
    %180 = vmatpush.bf16.msra.mxu0 %v163
    %181 = vmatpush.bf16.msra.mxu0 %v162
    %182 = vmatpush.bf16.msra.mxu0 %v161
    %183 = vmatpush.bf16.msra.mxu0 %v160
    %184 = vmatmul.bf16.gmra.mxu0 %v107
    %v185 = vpop.f32.mrf.mxu0
    %v186 = vadd.f32 %v126, %v185
    %v187 = vpop.f32.mrf.mxu0
    %188 = vdwg.mxu0
    %v189 = vmax.f32 %v186, 0.0
    %v190 = vadd.f32 %v189, %v106
    %v191 = vpack.c.bf16 %v190, %v190
    %v192 = vld [vmem:[#allocation8] sm:$0xf]
    %v193 = vld [vmem:[#allocation8 + $0x4] sm:$0xf]
    %v194 = vld [vmem:[#allocation8 + $0x8] sm:$0xf]
    %v195 = vld [vmem:[#allocation8 + $0xc] sm:$0xf]
    %v196 = vld [vmem:[#allocation8 + $0x10] sm:$0xf]
    %v197 = vld [vmem:[#allocation8 + $0x14] sm:$0xf]
    %v198 = vld [vmem:[#allocation8 + $0x18] sm:$0xf]
    %v199 = vld [vmem:[#allocation8 + $0x1c] sm:$0xf]
    %v200 = vld [vmem:[#allocation8 + $0x20] sm:$0xf]
    %v201 = vld [vmem:[#allocation8 + $0x24] sm:$0xf]
    %v202 = vld [vmem:[#allocation8 + $0x28] sm:$0xf]
    %v203 = vld [vmem:[#allocation8 + $0x2c] sm:$0xf]
    %v204 = vld [vmem:[#allocation8 + $0x30] sm:$0xf]
    %v205 = vld [vmem:[#allocation8 + $0x34] sm:$0xf]
    %v206 = vld [vmem:[#allocation8 + $0x38] sm:$0xf]
    %v207 = vld [vmem:[#allocation8 + $0x3c] sm:$0xf]
    %v208 = vld [vmem:[%s5] sm:$0x1]
    %v210 = vperm.slane %v208, 0
    %v228 = vunpack.c.l.b16 %v192
    %v229 = vunpack.c.l.b16 %v193
    %v230 = vunpack.c.l.b16 %v194
    %v231 = vunpack.c.l.b16 %v195
    %v232 = vunpack.c.l.b16 %v196
    %v233 = vunpack.c.l.b16 %v197
    %v234 = vunpack.c.l.b16 %v198
    %v235 = vunpack.c.l.b16 %v199
    %v236 = vunpack.c.l.b16 %v200
    %v237 = vunpack.c.l.b16 %v201
    %v238 = vunpack.c.l.b16 %v202
    %v239 = vunpack.c.l.b16 %v203
    %v240 = vunpack.c.l.b16 %v204
    %v241 = vunpack.c.l.b16 %v205
    %v242 = vunpack.c.l.b16 %v206
    %v243 = vunpack.c.l.b16 %v207
    %v244 = vpack.c.b16 %v229, %v228
    %v245 = vpack.c.b16 %v231, %v230
    %v246 = vpack.c.b16 %v233, %v232
    %v247 = vpack.c.b16 %v235, %v234
    %v248 = vpack.c.b16 %v237, %v236
    %v249 = vpack.c.b16 %v239, %v238
    %v250 = vpack.c.b16 %v241, %v240
    %v251 = vpack.c.b16 %v243, %v242
    %260 = vmatpush.bf16.msra.mxu0 %v251
    %261 = vmatpush.bf16.msra.mxu0 %v250
    %262 = vmatpush.bf16.msra.mxu0 %v249
    %263 = vmatpush.bf16.msra.mxu0 %v248
    %264 = vmatpush.bf16.msra.mxu0 %v247
    %265 = vmatpush.bf16.msra.mxu0 %v246
    %266 = vmatpush.bf16.msra.mxu0 %v245
    %267 = vmatpush.bf16.msra.mxu0 %v244
    %268 = vmatmul.bf16.gmra.mxu0 %v191
    %v269 = vpop.f32.mrf.mxu0
    %v270 = vadd.f32 %v210, %v269
    %v271 = vpop.f32.mrf.mxu0
    %272 = vdwg.mxu0
    %273 = vst [vmem:[#allocation10] sm:$0xff] %v270
    // Predicated region
    $region42: #{tpu_custom_call.1} parent=1 // pred_check
      _
    $region43: #{tpu_custom_call.1} parent=1 // pred_check_branch
      %275 = sbr.rel (0) target = $region45
    $region44: #{tpu_custom_call.1} parent=1 // pred_region
      %277 = vsyncadd [#allocation4], 0
      %s279 = sshll.u32 [#allocation10], 4
      %s280 = int_to_ptr.vmem [resolvable:$true] %s279
      %s281 = sshll.u32 %s6, 4
      %s282 = int_to_ptr.hbm [resolvable:$true] %s281
      %284 = dma.vmem_to_hbm [thread:$0]  %s280, 128, %s282, [#allocation4]
    $region45: #{tpu_custom_call.1} parent=1 // pred_fallthru
      _
    // Predicated region
    $region46: #{tpu_custom_call.1} parent=1 // pred_check
      _
    $region47: #{tpu_custom_call.1} parent=1 // pred_check_branch
      %286 = sbr.rel (0) target = $region49
    $region48: #{tpu_custom_call.1} parent=1 // pred_region
      %288 = dma.done [#allocation4], 128
    $region49: #{tpu_custom_call.1} parent=1 // pred_fallthru
      _
    %289 = vsyncpa [#allocation3], 1
    %290 = vsyncpa [#allocation6], 1
    %291 = vsyncpa [#allocation9], 1
    %292 = vsyncpa [#allocation4], 1

</llo_original>
